<compile_context>
chip_gen: v7x
topology: tpu7x:2x2x1
jax: 0.10.0
libtpu: 0.0.40
codegen_flags: <defaults>
</compile_context>

<pallas_src>
import functools

import jax
import jax.numpy as jnp
from jax import lax
from jax.experimental import pallas as pl
from jax.experimental.pallas import tpu as pltpu


# --------------------------------------------------------------------------- #
# Kernels
# --------------------------------------------------------------------------- #
def _se_kernel(x_ref, w1_ref, w2_ref, o_ref, *, inv_hw):
    """Single-pass SE: pool + FC stack + scale on a (Bt, C, HW) batch block."""
    x = x_ref[...]                                               # native dtype
    # squeeze: global average pool, f32 accumulation
    y = jnp.sum(x, axis=2, dtype=jnp.float32) * inv_hw           # (Bt, C) f32
    # excitation: fc1 -> relu -> fc2 -> sigmoid (weights pre-transposed, f32)
    h = jnp.maximum(
        jnp.dot(y, w1_ref[...], preferred_element_type=jnp.float32), 0.0)
    s = jax.nn.sigmoid(
        jnp.dot(h, w2_ref[...], preferred_element_type=jnp.float32))
    # scale: per-channel gate, multiply in the streaming dtype
    o_ref[...] = (x * s.astype(x.dtype)[:, :, None]).astype(o_ref.dtype)


def _se_gate_kernel(x_ref, w1_ref, w2_ref, gate_ref, acc_ref, *,
                    inv_hw, hw_total, hw_chunk, mask_tail):
    """Two-pass, pass 1: accumulate per-(b,c) sums over HW chunks, emit gate."""
    h_i = pl.program_id(1)

    @pl.when(h_i == 0)
    def _():
        acc_ref[...] = jnp.zeros_like(acc_ref)

    x = x_ref[...]
    if mask_tail:
        # Exact pooling: zero the out-of-bounds tail of the last HW chunk.
        col = lax.broadcasted_iota(jnp.int32, x.shape, 2) + h_i * hw_chunk
        x = jnp.where(col < hw_total, x, jnp.zeros_like(x))
    acc_ref[...] += jnp.sum(x, axis=2, dtype=jnp.float32)        # (Bt, C) f32

    @pl.when(h_i == pl.num_programs(1) - 1)
    def _():
        y = acc_ref[...] * inv_hw
        h = jnp.maximum(
            jnp.dot(y, w1_ref[...], preferred_element_type=jnp.float32), 0.0)
        s = jax.nn.sigmoid(
            jnp.dot(h, w2_ref[...], preferred_element_type=jnp.float32))
        gate_ref[...] = s[:, :, None]                            # (Bt, C, 1)


def _se_scale_kernel(x_ref, gate_ref, o_ref):
    """Two-pass, pass 2: apply the per-(b,c) gate to an (Bt, C, HWc) tile."""
    x = x_ref[...]
    o_ref[...] = (x * gate_ref[...].astype(x.dtype)).astype(o_ref.dtype)


# --------------------------------------------------------------------------- #
# Sizing helpers
# --------------------------------------------------------------------------- #
def _vmem_capacity_bytes():
    try:
        return int(pltpu.get_tpu_info().vmem_capacity_bytes)
    except Exception:
        return 64 * 1024 * 1024  # conservative (v7x per-TensorCore)


def _vmem_limit(block_bytes, w_bytes, cap):
    cap_use = int(cap * 0.85)                       # headroom for compiler scratch
    needed = 4 * block_bytes + 2 * w_bytes + (2 << 20)
    return int(min(cap_use, max(needed, 32 << 20)))


# --------------------------------------------------------------------------- #
# Wrapper
# --------------------------------------------------------------------------- #
def _se_single_pass(x, w1t, w2t, *, budget, cap, w_bytes):
    B, C, HW = x.shape
    Cr = w1t.shape[1]
    itemsize = x.dtype.itemsize
    bytes_per_batch = C * HW * itemsize

    bt = max(1, min(B, budget // max(1, bytes_per_batch)))
    # Prefer >=4 grid steps (software pipelining; feeds both v7x TensorCores)
    # as long as each block stays large enough to amortize per-step overhead.
    if B >= 4:
        bt4 = pl.cdiv(B, 4)
        if bt4 * bytes_per_batch >= (512 << 10):
            bt = min(bt, bt4)
    n = pl.cdiv(B, bt)
    # Prefer an even step count when >1 (v7x: two TCs share the parallel axis).
    if n > 1 and n % 2 == 1:
        bt_alt = pl.cdiv(B, n + 1)
        if bt_alt >= 1 and pl.cdiv(B, bt_alt) % 2 == 0:
            bt = bt_alt
            n = pl.cdiv(B, bt_alt)

    block_bytes = bt * bytes_per_batch
    kernel = functools.partial(_se_kernel, inv_hw=float(1.0 / HW))
    return pl.pallas_call(
        kernel,
        out_shape=jax.ShapeDtypeStruct((B, C, HW), x.dtype),
        grid_spec=pltpu.PrefetchScalarGridSpec(
            num_scalar_prefetch=0,
            grid=(n,),
            in_specs=[
                pl.BlockSpec((bt, C, HW), lambda b: (b, 0, 0)),
                pl.BlockSpec((C, Cr), lambda b: (0, 0)),
                pl.BlockSpec((Cr, C), lambda b: (0, 0)),
            ],
            out_specs=pl.BlockSpec((bt, C, HW), lambda b: (b, 0, 0)),
        ),
        compiler_params=pltpu.CompilerParams(
            dimension_semantics=("parallel",),
            vmem_limit_bytes=_vmem_limit(block_bytes, w_bytes, cap),
        ),
    )(x, w1t, w2t)


def _se_two_pass(x, w1t, w2t, *, budget, cap, w_bytes):
    B, C, HW = x.shape
    Cr = w1t.shape[1]
    itemsize = x.dtype.itemsize

    # Largest lane-aligned (multiple-of-128) spatial chunk that fits the budget.
    hwc = max(128, (budget // max(1, C * itemsize)) // 128 * 128)
    if hwc >= HW:
        hwc = HW
    bt = max(1, min(B, budget // max(1, C * hwc * itemsize)))
    nb = pl.cdiv(B, bt)
    nh = pl.cdiv(HW, hwc)
    block_bytes = bt * C * hwc * itemsize
    vmem = _vmem_limit(block_bytes, w_bytes, cap)

    # Pass 1: pool over HW chunks (reduction axis last), FC stack -> gate.
    gate_kernel = functools.partial(
        _se_gate_kernel, inv_hw=float(1.0 / HW), hw_total=HW, hw_chunk=hwc,
        mask_tail=(HW % hwc) != 0)
    gate = pl.pallas_call(
        gate_kernel,
        out_shape=jax.ShapeDtypeStruct((B, C, 1), jnp.float32),
        grid_spec=pltpu.PrefetchScalarGridSpec(
            num_scalar_prefetch=0,
            grid=(nb, nh),
            in_specs=[
                pl.BlockSpec((bt, C, hwc), lambda b, h: (b, 0, h)),
                pl.BlockSpec((C, Cr), lambda b, h: (0, 0)),
                pl.BlockSpec((Cr, C), lambda b, h: (0, 0)),
            ],
            out_specs=pl.BlockSpec((bt, C, 1), lambda b, h: (b, 0, 0)),
            scratch_shapes=[pltpu.VMEM((bt, C), jnp.float32)],
        ),
        compiler_params=pltpu.CompilerParams(
            dimension_semantics=("parallel", "arbitrary"),
            vmem_limit_bytes=vmem,
        ),
    )(x, w1t, w2t)

    # Pass 2: re-stream x over independent (batch, HW-chunk) tiles and scale.
    return pl.pallas_call(
        _se_scale_kernel,
        out_shape=jax.ShapeDtypeStruct((B, C, HW), x.dtype),
        grid_spec=pltpu.PrefetchScalarGridSpec(
            num_scalar_prefetch=0,
            grid=(nb, nh),
            in_specs=[
                pl.BlockSpec((bt, C, hwc), lambda b, h: (b, 0, h)),
                pl.BlockSpec((bt, C, 1), lambda b, h: (b, 0, 0)),
            ],
            out_specs=pl.BlockSpec((bt, C, hwc), lambda b, h: (b, 0, h)),
        ),
        compiler_params=pltpu.CompilerParams(
            dimension_semantics=("parallel", "parallel"),
            vmem_limit_bytes=vmem,
        ),
    )(x, gate)


def se_block(x, w1, w2, *, block_bytes_budget=None):
    """SEBlock forward.

    x : (B, C, H, W) NCHW, any float dtype (f32/bf16).
    w1: (C//r, C)  PyTorch nn.Linear layout (out, in), bias-free.
    w2: (C, C//r)  PyTorch nn.Linear layout (out, in), bias-free.
    """
    B, C, H, W = x.shape
    HW = H * W
    itemsize = x.dtype.itemsize

    # Hoist weight transpose + cast out of the hot loop: (out,in) -> (in,out), f32.
    w1t = jnp.asarray(w1, jnp.float32).T                    # (C, Cr)
    w2t = jnp.asarray(w2, jnp.float32).T                    # (Cr, C)
    w_bytes = (w1t.size + w2t.size) * 4

    cap = _vmem_capacity_bytes()
    # Per-block budget ~ VMEM/8 so 2x(in)+2x(out) uses ~half of VMEM on every gen
    # (v5e/v6e -> ~16 MiB blocks, v7x -> ~8 MiB).
    budget = int(block_bytes_budget) if block_bytes_budget else max(1 << 20, cap // 8)

    # No spatial padding: (B, C, HW) view is a free metadata reshape and the
    # kernel blocks use the full (C, HW) extents in the last two dims.
    x_flat = x.reshape(B, C, HW)

    bytes_per_batch = C * HW * itemsize
    if bytes_per_batch <= budget:
        out_flat = _se_single_pass(x_flat, w1t, w2t,
                                   budget=budget, cap=cap, w_bytes=w_bytes)
    else:
        out_flat = _se_two_pass(x_flat, w1t, w2t,
                                budget=budget, cap=cap, w_bytes=w_bytes)
    return out_flat.reshape(B, C, H, W)


# --------------------------------------------------------------------------- #
# Reference + self-test
# --------------------------------------------------------------------------- #
def _reference(x, w1, w2):
    y = jnp.mean(x, axis=(2, 3))                 # (B, C)
    h = jnp.maximum(y @ w1.T, 0.0)               # (B, C//r)
    s = jax.nn.sigmoid(h @ w2.T)                 # (B, C)
    return x * s[:, :, None, None]


if __name__ == "__main__":
    key = jax.random.PRNGKey(0)

    # Primary shape: SEBlock(channel=32, reduction=16) on a (2, 32, 16, 16) input.
    B, C, H, W = 2, 32, 16, 16
    Cr = C // 16
    kx, k1, k2 = jax.random.split(key, 3)
    x = jax.random.normal(kx, (B, C, H, W), dtype=jnp.float32)
    # deterministic synthetic weights, PyTorch nn.Linear layout: (out, in)
    w1 = jax.random.normal(k1, (Cr, C), dtype=jnp.float32) * 0.1
    w2 = jax.random.normal(k2, (C, Cr), dtype=jnp.float32) * 0.1

    out = jax.block_until_ready(se_block(x, w1, w2))
    ref = _reference(x, w1, w2)
    assert out.shape == (B, C, H, W)
    assert jnp.allclose(out, ref, atol=1e-5, rtol=1e-5), "single-pass mismatch"

    # Exercise the cdiv / partial-last-batch-block path (odd B, small blocks).
    x3 = jax.random.normal(kx, (3, C, H, W), dtype=jnp.float32)
    out3 = jax.block_until_ready(se_block(x3, w1, w2, block_bytes_budget=64 * 1024))
    assert jnp.allclose(out3, _reference(x3, w1, w2), atol=1e-5, rtol=1e-5), \
        "partial-batch-block mismatch"

    # Exercise the two-pass HW-chunked fallback with a non-multiple-of-128 tail.
    xb = jax.random.normal(kx, (2, C, 12, 12), dtype=jnp.float32)   # HW = 144
    outb = jax.block_until_ready(se_block(xb, w1, w2, block_bytes_budget=16 * 1024))
    assert jnp.allclose(outb, _reference(xb, w1, w2), atol=1e-5, rtol=1e-5), \
        "two-pass mismatch"

    print("KERNEL_OK")
</pallas_src>

<mosaic_0001>
module attributes {stable_mosaic.version = 11 : i64} {
  func.func @_se_kernel(%arg0: i32, %arg1: memref<2x32x256xf32, #tpu.memory_space<vmem>>, %arg2: memref<32x2xf32, #tpu.memory_space<vmem>>, %arg3: memref<2x32xf32, #tpu.memory_space<vmem>>, %arg4: memref<2x32x256xf32, #tpu.memory_space<vmem>>) attributes {dimension_semantics = [#tpu.dimension_semantics<parallel>], iteration_bounds = array<i64: 1>, scalar_prefetch = 0 : i64, scratch_operands = 0 : i64, tpu.core_type = #tpu.core_type<tc>, window_params = [{transform_indices = @transform_0, window_bounds = array<i64: 2, 32, 256>}, {pipeline_mode = #tpu.pipeline_mode<synchronous>, transform_indices = @transform_1, window_bounds = array<i64: 32, 2>}, {pipeline_mode = #tpu.pipeline_mode<synchronous>, transform_indices = @transform_2, window_bounds = array<i64: 2, 32>}, {transform_indices = @transform_3, window_bounds = array<i64: 2, 32, 256>}]} {
    %c0 = arith.constant 0 : index
    %c0_0 = arith.constant 0 : index
    %c0_1 = arith.constant 0 : index
    %0 = vector.load %arg1[%c0, %c0_0, %c0_1] : memref<2x32x256xf32, #tpu.memory_space<vmem>>, vector<2x32x256xf32>
    %cst = arith.constant dense<0.000000e+00> : vector<2x32xf32>
    %1 = vector.multi_reduction <add>, %0, %cst [2] : vector<2x32x256xf32> to vector<2x32xf32>
    %cst_2 = arith.constant 3.906250e-03 : f32
    %2 = vector.broadcast %cst_2 : f32 to vector<2x32xf32>
    %3 = arith.mulf %1, %2 : vector<2x32xf32>
    %c0_3 = arith.constant 0 : index
    %c0_4 = arith.constant 0 : index
    %4 = vector.load %arg2[%c0_3, %c0_4] : memref<32x2xf32, #tpu.memory_space<vmem>>, vector<32x2xf32>
    %cst_5 = arith.constant dense<0.000000e+00> : vector<2x2xf32>
    %5 = tpu.matmul %3, %4, %cst_5 {dimension_numbers = #tpu.dot_dimension_numbers<[1], [0], [0], [1], [0, 0, 1, 1], [], []>} : vector<2x32xf32>, vector<32x2xf32>, vector<2x2xf32> -> vector<2x2xf32>
    %cst_6 = arith.constant 0.000000e+00 : f32
    %6 = vector.broadcast %cst_6 : f32 to vector<2x2xf32>
    %7 = arith.maximumf %5, %6 : vector<2x2xf32>
    %c0_7 = arith.constant 0 : index
    %c0_8 = arith.constant 0 : index
    %8 = vector.load %arg3[%c0_7, %c0_8] : memref<2x32xf32, #tpu.memory_space<vmem>>, vector<2x32xf32>
    %cst_9 = arith.constant dense<0.000000e+00> : vector<2x32xf32>
    %9 = tpu.matmul %7, %8, %cst_9 {dimension_numbers = #tpu.dot_dimension_numbers<[1], [0], [0], [1], [0, 0, 1, 1], [], []>} : vector<2x2xf32>, vector<2x32xf32>, vector<2x32xf32> -> vector<2x32xf32>
    %10 = arith.negf %9 : vector<2x32xf32>
    %11 = math.exp %10 : vector<2x32xf32>
    %cst_10 = arith.constant 1.000000e+00 : f32
    %12 = vector.broadcast %cst_10 : f32 to vector<2x32xf32>
    %13 = arith.addf %12, %11 : vector<2x32xf32>
    %14 = arith.divf %12, %13 : vector<2x32xf32>
    %15 = vector.shape_cast %14 : vector<2x32xf32> to vector<2x32x1xf32>
    %16 = vector.broadcast %15 : vector<2x32x1xf32> to vector<2x32x256xf32>
    %17 = arith.mulf %0, %16 : vector<2x32x256xf32>
    %c0_11 = arith.constant 0 : index
    %c0_12 = arith.constant 0 : index
    %c0_13 = arith.constant 0 : index
    %18 = vector.load %arg4[%c0_11, %c0_12, %c0_13] : memref<2x32x256xf32, #tpu.memory_space<vmem>>, vector<2x32x256xf32>
    tpu.vector_store %arg4[%c0_11, %c0_12, %c0_13], %17 {strides = array<i32>} : memref<2x32x256xf32, #tpu.memory_space<vmem>>, vector<2x32x256xf32>,
    return
  }
  func.func @transform_0(%arg0: i32) -> (i32, i32, i32) {
    %c0_i32 = arith.constant 0 : i32
    %c0_i32_0 = arith.constant 0 : i32
    %c0_i32_1 = arith.constant 0 : i32
    return %arg0, %c0_i32, %c0_i32_0 : i32, i32, i32
  }
  func.func @transform_1(%arg0: i32) -> (i32, i32) {
    %c0_i32 = arith.constant 0 : i32
    %c0_i32_0 = arith.constant 0 : i32
    %c0_i32_1 = arith.constant 0 : i32
    return %c0_i32, %c0_i32_0 : i32, i32
  }
  func.func @transform_2(%arg0: i32) -> (i32, i32) {
    %c0_i32 = arith.constant 0 : i32
    %c0_i32_0 = arith.constant 0 : i32
    %c0_i32_1 = arith.constant 0 : i32
    return %c0_i32, %c0_i32_0 : i32, i32
  }
  func.func @transform_3(%arg0: i32) -> (i32, i32, i32) {
    %c0_i32 = arith.constant 0 : i32
    %c0_i32_0 = arith.constant 0 : i32
    %c0_i32_1 = arith.constant 0 : i32
    return %arg0, %c0_i32, %c0_i32_0 : i32, i32, i32
  }
}

</mosaic_0001>

<llo_original>
// kernel: tpu_custom_call.1
$region0: #{tpu_custom_call.1}
  #allocation0 [shape = 'u32[]', space=smem, size = 0x4, offset = 0x4, fixed_abs, tag = 'smem constant byte address 0x4 - core index']
  #allocation1 [shape = 'u32[144,128]{1,0:T(1,128)}', space=vmem, size = 0x12000, scoped, tag = 'internal scratch']
  %s0 = inlined_call_operand.hbm [shape: f32[2,32,256], index: 0, kind: input, shape index: {}]
  %s1 = inlined_call_operand.vmem [shape: f32[32,2], index: 1, kind: input, shape index: {}]
  %s2 = inlined_call_operand.vmem [shape: f32[2,32], index: 2, kind: input, shape index: {}]
  %s3 = inlined_call_operand.hbm [shape: f32[2,32,256], index: 3, kind: output, shape index: {}]
  %s4 = sld [smem:[#allocation0]]
  $region26: #{tpu_custom_call.1} parent=0
    _
  %s6 = ssub.s32 1, %s4
  %s7 = scalar_select 0, %s6, %s4
  $region1: #{tpu_custom_call.1} parent=0
    #allocation2 [shape = 'u8[65536]{0}', space=vmem, size = 0x10000, scoped, tag = 'input window, operand 0, single buffered']
    #allocation3 [shape = 's32[1]{0}', space=sflag, size = 0x4, scoped, tag = 'scoped memory for tpu_custom_call.1']
    #allocation4 [shape = 's32[1]{0}', space=sflag, size = 0x4, scoped, tag = 'scoped memory for tpu_custom_call.1']
    #allocation5 [shape = 'u8[65536]{0}', space=vmem, size = 0x10000, scoped, tag = 'output window, operand 0, single buffered']
    %8 = vsyncpa [#allocation3], 0
    %9 = vsyncpa [#allocation4], 0
    // Predicated region
    $region2: #{tpu_custom_call.1} parent=1 // pred_check
      _
    $region3: #{tpu_custom_call.1} parent=1 // pred_check_branch
      %11 = sbr.rel (0) target = $region5
    $region4: #{tpu_custom_call.1} parent=1 // pred_region
      %s13 = ssub.s32 2048, 2048
      %14 = vsyncadd [#allocation3], %s13
      %s15 = sshll.u32 [#allocation2], 4
      %s16 = int_to_ptr.vmem [resolvable:$true] %s15
      %21 = dma.hbm_to_vmem [thread:$0]  %s0, 2048, %s16, [#allocation3], 256, 256, 16
    $region5: #{tpu_custom_call.1} parent=1 // pred_fallthru
      _
    // Predicated region
    $region6: #{tpu_custom_call.1} parent=1 // pred_check
      _
    $region7: #{tpu_custom_call.1} parent=1 // pred_check_branch
      %23 = sbr.rel (0) target = $region9
    $region8: #{tpu_custom_call.1} parent=1 // pred_region
      _
    $region9: #{tpu_custom_call.1} parent=1 // pred_fallthru
      _
    // Predicated region
    $region10: #{tpu_custom_call.1} parent=1 // pred_check
      _
    $region11: #{tpu_custom_call.1} parent=1 // pred_check_branch
      %25 = sbr.rel (0) target = $region13
    $region12: #{tpu_custom_call.1} parent=1 // pred_region
      _
    $region13: #{tpu_custom_call.1} parent=1 // pred_fallthru
      _
    // Predicated region
    $region14: #{tpu_custom_call.1} parent=1 // pred_check
      _
    $region15: #{tpu_custom_call.1} parent=1 // pred_check_branch
      %27 = sbr.rel (0) target = $region17
    $region16: #{tpu_custom_call.1} parent=1 // pred_region
      %28 = dma.done [#allocation3], 2048
    $region17: #{tpu_custom_call.1} parent=1 // pred_fallthru
      _
    %v29 = vld [vmem:[#allocation2] sm:$0xff]
    %v30 = vld [vmem:[#allocation2 + $0x8] sm:$0xff]
    %v31 = vld [vmem:[#allocation2 + $0x10] sm:$0xff]
    %v32 = vld [vmem:[#allocation2 + $0x18] sm:$0xff]
    %v33 = vld [vmem:[#allocation2 + $0x20] sm:$0xff]
    %v34 = vld [vmem:[#allocation2 + $0x28] sm:$0xff]
    %v35 = vld [vmem:[#allocation2 + $0x30] sm:$0xff]
    %v36 = vld [vmem:[#allocation2 + $0x38] sm:$0xff]
    %v37 = vld [vmem:[#allocation2 + $0x40] sm:$0xff]
    %v38 = vld [vmem:[#allocation2 + $0x48] sm:$0xff]
    %v39 = vld [vmem:[#allocation2 + $0x50] sm:$0xff]
    %v40 = vld [vmem:[#allocation2 + $0x58] sm:$0xff]
    %v41 = vld [vmem:[#allocation2 + $0x60] sm:$0xff]
    %v42 = vld [vmem:[#allocation2 + $0x68] sm:$0xff]
    %v43 = vld [vmem:[#allocation2 + $0x70] sm:$0xff]
    %v44 = vld [vmem:[#allocation2 + $0x78] sm:$0xff]
    %v45 = vadd.f32 %v29, %v30
    %46 = vadd.xlane.f32.xlu0 %v45
    %v47 = vpop.xlane.xlu0 %46
    %v48 = vadd.f32 %v31, %v32
    %49 = vadd.xlane.f32.xlu0 %v48
    %v50 = vpop.xlane.xlu0 %49
    %v51 = vadd.f32 %v33, %v34
    %52 = vadd.xlane.f32.xlu0 %v51
    %v53 = vpop.xlane.xlu0 %52
    %v54 = vadd.f32 %v35, %v36
    %55 = vadd.xlane.f32.xlu0 %v54
    %v56 = vpop.xlane.xlu0 %55
    %v57 = vadd.f32 %v37, %v38
    %58 = vadd.xlane.f32.xlu0 %v57
    %v59 = vpop.xlane.xlu0 %58
    %v60 = vadd.f32 %v39, %v40
    %61 = vadd.xlane.f32.xlu0 %v60
    %v62 = vpop.xlane.xlu0 %61
    %v63 = vadd.f32 %v41, %v42
    %64 = vadd.xlane.f32.xlu0 %v63
    %v65 = vpop.xlane.xlu0 %64
    %v66 = vadd.f32 %v43, %v44
    %67 = vadd.xlane.f32.xlu0 %v66
    %v68 = vpop.xlane.xlu0 %67
    %v69 = vmul.f32 %v47, 0.00390625
    %v70 = vmul.f32 %v50, 0.00390625
    %v71 = vmul.f32 %v53, 0.00390625
    %v72 = vmul.f32 %v56, 0.00390625
    %v73 = vmul.f32 %v59, 0.00390625
    %v74 = vmul.f32 %v62, 0.00390625
    %v75 = vmul.f32 %v65, 0.00390625
    %v76 = vmul.f32 %v68, 0.00390625
    %v77 = vld [vmem:[%s1] sm:$0xff]
    %v78 = vld [vmem:[%s1 + $0x8] sm:$0xff]
    %v79 = vld [vmem:[%s1 + $0x10] sm:$0xff]
    %v80 = vld [vmem:[%s1 + $0x18] sm:$0xff]
    %v89 = vlaneseq
    %v90 = vand.u32 %v89, 127
    %v91 = vlaneseq
    %v92 = vshrl.u32 %v91, 7
    %v93 = vsub.s32 %v90, %v92
    %v94 = vrot.slane %v69, %v93
    %v95 = vadd.s32 %v90, 4294967288
    %v96 = vlaneseq
    %v97 = vshrl.u32 %v96, 7
    %v98 = vsub.s32 %v95, %v97
    %v99 = vrot.slane %v70, %v98
    %vm100 = vcmask 130112
    %v101 = vsel %vm100, %v99, %v94
    %v102 = vadd.s32 %v90, 4294967280
    %v103 = vlaneseq
    %v104 = vshrl.u32 %v103, 7
    %v105 = vsub.s32 %v102, %v104
    %v106 = vrot.slane %v71, %v105
    %vm107 = vcmask 195712
    %v108 = vsel %vm107, %v106, %v101
    %v109 = vadd.s32 %v90, 4294967272
    %v110 = vlaneseq
    %v111 = vshrl.u32 %v110, 7
    %v112 = vsub.s32 %v109, %v111
    %v113 = vrot.slane %v72, %v112
    %vm114 = vcmask 261312
    %v115 = vsel %vm114, %v113, %v108
    %v116 = vlaneseq
    %v117 = vshrl.u32 %v116, 7
    %v118 = vsub.s32 %v90, %v117
    %v119 = vrot.slane %v73, %v118
    %v120 = vlaneseq
    %v121 = vshrl.u32 %v120, 7
    %v122 = vsub.s32 %v95, %v121
    %v123 = vrot.slane %v74, %v122
    %v124 = vsel %vm100, %v123, %v119
    %v125 = vlaneseq
    %v126 = vshrl.u32 %v125, 7
    %v127 = vsub.s32 %v102, %v126
    %v128 = vrot.slane %v75, %v127
    %v129 = vsel %vm107, %v128, %v124
    %v130 = vlaneseq
    %v131 = vshrl.u32 %v130, 7
    %v132 = vsub.s32 %v109, %v131
    %v133 = vrot.slane %v76, %v132
    %v134 = vsel %vm114, %v133, %v129
    %vm135 = vcmask 1041409
    %v136 = vsel %vm135, %v134, %v115
    %vm137 = vcmask 261120
    %v138 = vsel %vm137, %v136, 0
    %140 = vmatprep.subr.mxu0 0.0
    %141 = vmatpush1.msra.mxu0 %v77
    %142 = vmatprep.subr.mxu0 0.0
    %143 = vmatpush1.msra.mxu0 %v78
    %144 = vmatprep.subr.mxu0 0.0
    %145 = vmatpush1.msra.mxu0 %v79
    %146 = vmatprep.subr.mxu0 0.0
    %147 = vmatpush1.msra.mxu0 %v80
    %148 = vmatprep.subr.mxu0 0.0
    %149 = vmatpush1.msra.mxu0 0.0
    %150 = vmatprep.subr.mxu0 0.0
    %151 = vmatpush1.msra.mxu0 0.0
    %152 = vmatprep.subr.mxu0 0.0
    %153 = vmatpush1.msra.mxu0 0.0
    %154 = vmatprep.subr.mxu0 0.0
    %155 = vmatpush1.msra.mxu0 0.0
    %156 = vmatprep.subr.mxu0 0.0
    %157 = vmatpush1.msra.mxu0 0.0
    %158 = vmatprep.subr.mxu0 0.0
    %159 = vmatpush1.msra.mxu0 0.0
    %160 = vmatprep.subr.mxu0 0.0
    %161 = vmatpush1.msra.mxu0 0.0
    %162 = vmatprep.subr.mxu0 0.0
    %163 = vmatpush1.msra.mxu0 0.0
    %164 = vmatprep.subr.mxu0 0.0
    %165 = vmatpush1.msra.mxu0 0.0
    %166 = vmatprep.subr.mxu0 0.0
    %167 = vmatpush1.msra.mxu0 0.0
    %168 = vmatprep.subr.mxu0 0.0
    %169 = vmatpush1.msra.mxu0 0.0
    %170 = vmatprep.subr.mxu0 0.0
    %171 = vmatpush1.msra.mxu0 0.0
    %172 = vmatprep.subr.mxu0 0.0
    %173 = vmatpush1.msra.mxu0 0.0
    %174 = vmatprep.subr.mxu0 0.0
    %175 = vmatpush1.msra.mxu0 0.0
    %176 = vmatprep.subr.mxu0 0.0
    %177 = vmatpush1.msra.mxu0 0.0
    %178 = vmatprep.subr.mxu0 0.0
    %179 = vmatpush1.msra.mxu0 0.0
    %180 = vmatprep.subr.mxu0 0.0
    %181 = vmatpush1.msra.mxu0 0.0
    %182 = vmatprep.subr.mxu0 0.0
    %183 = vmatpush1.msra.mxu0 0.0
    %184 = vmatprep.subr.mxu0 0.0
    %185 = vmatpush1.msra.mxu0 0.0
    %186 = vmatprep.subr.mxu0 0.0
    %187 = vmatpush1.msra.mxu0 0.0
    %188 = vmatprep.subr.mxu0 0.0
    %189 = vmatpush1.msra.mxu0 0.0
    %190 = vmatprep.subr.mxu0 0.0
    %191 = vmatpush1.msra.mxu0 0.0
    %192 = vmatprep.subr.mxu0 0.0
    %193 = vmatpush1.msra.mxu0 0.0
    %194 = vmatprep.subr.mxu0 0.0
    %195 = vmatpush1.msra.mxu0 0.0
    %196 = vmatprep.subr.mxu0 0.0
    %197 = vmatpush1.msra.mxu0 0.0
    %198 = vmatprep.subr.mxu0 0.0
    %199 = vmatpush1.msra.mxu0 0.0
    %200 = vmatprep.subr.mxu0 0.0
    %201 = vmatpush1.msra.mxu0 0.0
    %202 = vmatprep.subr.mxu0 0.0
    %203 = vmatpush1.msra.mxu0 0.0
    %204 = vmatprep.mubr.f32.mxu0 0.0
    %205 = vmatmul.mubr.f32.gmra.mrb[0].mxu0 %v138
    %v206 = vpop.f32.mrb[0].mxu0
    %v207 = vadd.f32 0.0, %v206
    %v208 = vpop.f32.mrb[0].mxu0
    %209 = vdwg.mxu0
    %v210 = vmax.f32 %v207, 0.0
    %v211 = vld [vmem:[%s2] sm:$0x3]
    %vm212 = vcmask 15360
    %v214 = vsel %vm212, %v210, 0
    %vm216 = vcmask 1041408
    %v218 = vsel %vm216, %v211, 0
    %220 = vmatprep.subr.mxu0 0.0
    %221 = vmatpush1.msra.mxu0 %v218
    %222 = vmatprep.subr.mxu0 0.0
    %223 = vmatpush1.msra.mxu0 0.0
    %224 = vmatprep.subr.mxu0 0.0
    %225 = vmatpush1.msra.mxu0 0.0
    %226 = vmatprep.subr.mxu0 0.0
    %227 = vmatpush1.msra.mxu0 0.0
    %228 = vmatprep.subr.mxu0 0.0
    %229 = vmatpush1.msra.mxu0 0.0
    %230 = vmatprep.subr.mxu0 0.0
    %231 = vmatpush1.msra.mxu0 0.0
    %232 = vmatprep.subr.mxu0 0.0
    %233 = vmatpush1.msra.mxu0 0.0
    %234 = vmatprep.subr.mxu0 0.0
    %235 = vmatpush1.msra.mxu0 0.0
    %236 = vmatprep.subr.mxu0 0.0
    %237 = vmatpush1.msra.mxu0 0.0
    %238 = vmatprep.subr.mxu0 0.0
    %239 = vmatpush1.msra.mxu0 0.0
    %240 = vmatprep.subr.mxu0 0.0
    %241 = vmatpush1.msra.mxu0 0.0
    %242 = vmatprep.subr.mxu0 0.0
    %243 = vmatpush1.msra.mxu0 0.0
    %244 = vmatprep.subr.mxu0 0.0
    %245 = vmatpush1.msra.mxu0 0.0
    %246 = vmatprep.subr.mxu0 0.0
    %247 = vmatpush1.msra.mxu0 0.0
    %248 = vmatprep.subr.mxu0 0.0
    %249 = vmatpush1.msra.mxu0 0.0
    %250 = vmatprep.subr.mxu0 0.0
    %251 = vmatpush1.msra.mxu0 0.0
    %252 = vmatprep.subr.mxu0 0.0
    %253 = vmatpush1.msra.mxu0 0.0
    %254 = vmatprep.subr.mxu0 0.0
    %255 = vmatpush1.msra.mxu0 0.0
    %256 = vmatprep.subr.mxu0 0.0
    %257 = vmatpush1.msra.mxu0 0.0
    %258 = vmatprep.subr.mxu0 0.0
    %259 = vmatpush1.msra.mxu0 0.0
    %260 = vmatprep.subr.mxu0 0.0
    %261 = vmatpush1.msra.mxu0 0.0
    %262 = vmatprep.subr.mxu0 0.0
    %263 = vmatpush1.msra.mxu0 0.0
    %264 = vmatprep.subr.mxu0 0.0
    %265 = vmatpush1.msra.mxu0 0.0
    %266 = vmatprep.subr.mxu0 0.0
    %267 = vmatpush1.msra.mxu0 0.0
    %268 = vmatprep.subr.mxu0 0.0
    %269 = vmatpush1.msra.mxu0 0.0
    %270 = vmatprep.subr.mxu0 0.0
    %271 = vmatpush1.msra.mxu0 0.0
    %272 = vmatprep.subr.mxu0 0.0
    %273 = vmatpush1.msra.mxu0 0.0
    %274 = vmatprep.subr.mxu0 0.0
    %275 = vmatpush1.msra.mxu0 0.0
    %276 = vmatprep.subr.mxu0 0.0
    %277 = vmatpush1.msra.mxu0 0.0
    %278 = vmatprep.subr.mxu0 0.0
    %279 = vmatpush1.msra.mxu0 0.0
    %280 = vmatprep.subr.mxu0 0.0
    %281 = vmatpush1.msra.mxu0 0.0
    %282 = vmatprep.subr.mxu0 0.0
    %283 = vmatpush1.msra.mxu0 0.0
    %284 = vmatprep.mubr.f32.mxu0 0.0
    %285 = vmatmul.mubr.f32.gmra.mrb[0].mxu0 %v214
    %v286 = vpop.f32.mrb[0].mxu0
    %v287 = vadd.f32 0.0, %v286
    %v288 = vpop.f32.mrb[0].mxu0
    %289 = vdwg.mxu0
    %v290 = vxor.u32 %v287, 2147483648
    %v291 = vmul.f32 %v290, 1.442695
    %v292 = vpow.pop %v291
    %v293 = vadd.f32 %v292, 1.0
    %v294 = vrcp.pop %v293
    %v295 = vmul.f32 1.0, %v294
    %v296 = vlaneseq
    %v297 = vshrl.u32 %v296, 7
    %v298 = vsub.s32 0, %v297
    %v299 = vrot.slane %v295, %v298
    %301 = vbcast.lane.b32.xlu0 %v299, 256
    %v302 = vpop.permute.xlu0 %301
    %s304 = sor.u32 256, 8
    %305 = vbcast.lane.b32.xlu0 %v299, %s304
    %v306 = vpop.permute.xlu0 %305
    %s308 = sor.u32 256, 16
    %309 = vbcast.lane.b32.xlu0 %v299, %s308
    %v310 = vpop.permute.xlu0 %309
    %s312 = sor.u32 256, 24
    %313 = vbcast.lane.b32.xlu0 %v299, %s312
    %v314 = vpop.permute.xlu0 %313
    %v315 = vlaneseq
    %v316 = vshrl.u32 %v315, 7
    %v317 = vsub.s32 1, %v316
    %v318 = vrot.slane %v295, %v317
    %320 = vbcast.lane.b32.xlu0 %v318, 256
    %v321 = vpop.permute.xlu0 %320
    %s323 = sor.u32 256, 8
    %324 = vbcast.lane.b32.xlu0 %v318, %s323
    %v325 = vpop.permute.xlu0 %324
    %s327 = sor.u32 256, 16
    %328 = vbcast.lane.b32.xlu0 %v318, %s327
    %v329 = vpop.permute.xlu0 %328
    %s331 = sor.u32 256, 24
    %332 = vbcast.lane.b32.xlu0 %v318, %s331
    %v333 = vpop.permute.xlu0 %332
    %v334 = vmul.f32 %v29, %v302
    %v335 = vmul.f32 %v30, %v302
    %v336 = vmul.f32 %v31, %v306
    %v337 = vmul.f32 %v32, %v306
    %v338 = vmul.f32 %v33, %v310
    %v339 = vmul.f32 %v34, %v310
    %v340 = vmul.f32 %v35, %v314
    %v341 = vmul.f32 %v36, %v314
    %v342 = vmul.f32 %v37, %v321
    %v343 = vmul.f32 %v38, %v321
    %v344 = vmul.f32 %v39, %v325
    %v345 = vmul.f32 %v40, %v325
    %v346 = vmul.f32 %v41, %v329
    %v347 = vmul.f32 %v42, %v329
    %v348 = vmul.f32 %v43, %v333
    %v349 = vmul.f32 %v44, %v333
    %350 = vst [vmem:[#allocation5] sm:$0xff] %v334
    %351 = vst [vmem:[#allocation5 + $0x8] sm:$0xff] %v335
    %352 = vst [vmem:[#allocation5 + $0x10] sm:$0xff] %v336
    %353 = vst [vmem:[#allocation5 + $0x18] sm:$0xff] %v337
    %354 = vst [vmem:[#allocation5 + $0x20] sm:$0xff] %v338
    %355 = vst [vmem:[#allocation5 + $0x28] sm:$0xff] %v339
    %356 = vst [vmem:[#allocation5 + $0x30] sm:$0xff] %v340
    %357 = vst [vmem:[#allocation5 + $0x38] sm:$0xff] %v341
    %358 = vst [vmem:[#allocation5 + $0x40] sm:$0xff] %v342
    %359 = vst [vmem:[#allocation5 + $0x48] sm:$0xff] %v343
    %360 = vst [vmem:[#allocation5 + $0x50] sm:$0xff] %v344
    %361 = vst [vmem:[#allocation5 + $0x58] sm:$0xff] %v345
    %362 = vst [vmem:[#allocation5 + $0x60] sm:$0xff] %v346
    %363 = vst [vmem:[#allocation5 + $0x68] sm:$0xff] %v347
    %364 = vst [vmem:[#allocation5 + $0x70] sm:$0xff] %v348
    %365 = vst [vmem:[#allocation5 + $0x78] sm:$0xff] %v349
    // Predicated region
    $region18: #{tpu_custom_call.1} parent=1 // pred_check
      _
    $region19: #{tpu_custom_call.1} parent=1 // pred_check_branch
      %367 = sbr.rel (0) target = $region21
    $region20: #{tpu_custom_call.1} parent=1 // pred_region
      %s369 = ssub.s32 2048, 2048
      %370 = vsyncadd [#allocation4], %s369
      %s371 = sshll.u32 [#allocation5], 4
      %s372 = int_to_ptr.vmem [resolvable:$true] %s371
      %377 = dma.vmem_to_hbm [thread:$0]  %s372, 2048, %s3, [#allocation4], 256, 256, 16
    $region21: #{tpu_custom_call.1} parent=1 // pred_fallthru
      _
    // Predicated region
    $region22: #{tpu_custom_call.1} parent=1 // pred_check
      _
    $region23: #{tpu_custom_call.1} parent=1 // pred_check_branch
      %379 = sbr.rel (0) target = $region25
    $region24: #{tpu_custom_call.1} parent=1 // pred_region
      %380 = dma.done [#allocation4], 2048
    $region25: #{tpu_custom_call.1} parent=1 // pred_fallthru
      _
    %381 = vsyncpa [#allocation3], 1
    %382 = vsyncpa [#allocation4], 1

</llo_original>
